<compile_context>
chip_gen: v7x
topology: tpu7x:2x2x1
jax: 0.10.0
libtpu: 0.0.40
codegen_flags: <defaults>
</compile_context>

<pallas_src>
import functools

import jax
import jax.numpy as jnp
from jax.experimental import pallas as pl
from jax.experimental.pallas import tpu as pltpu


def _pick_tile(dim, candidates):
    """Largest candidate that evenly divides `dim`, else the full dim."""
    for c in candidates:
        if dim >= c and dim % c == 0:
            return c
    return dim


# ----------------------------------------------------------------------------
# Dense: y = act(x @ w + b); bf16 in / bf16 out, f32 MXU accumulation
# ----------------------------------------------------------------------------
def _dense_kernel(x_ref, w_ref, b_ref, o_ref, acc_ref, *, activation):
    @pl.when(pl.program_id(2) == 0)
    def _():
        acc_ref[...] = jnp.zeros_like(acc_ref)

    # x and w are already bf16 -> no per-tile cast inside the MXU hot loop.
    acc_ref[...] += jnp.dot(x_ref[...], w_ref[...],
                            preferred_element_type=jnp.float32)

    @pl.when(pl.program_id(2) == pl.num_programs(2) - 1)
    def _():
        y = acc_ref[...] + b_ref[...]
        if activation == "gelu":
            # TODO(synk): HF BERT uses erf GELU; tanh approximation used here.
            y = jax.nn.gelu(y, approximate=True)
        elif activation == "tanh":
            y = jnp.tanh(y)
        o_ref[...] = y.astype(o_ref.dtype)


def dense(x, w, b, activation="none", tm_candidates=(512, 256, 128)):
    M, K = x.shape
    N = w.shape[1]
    tm = _pick_tile(M, tm_candidates)
    tn = _pick_tile(N, (512, 256, 128))
    tk = _pick_tile(K, (512, 256, 128))
    grid = (M // tm, N // tn, K // tk)

    cost = pl.CostEstimate(
        flops=2 * M * N * K,
        transcendentals=(M * N if activation != "none" else 0),
        bytes_accessed=M * K * 2 + K * N * 2 + N * 4 + M * N * 2,
    )
    return pl.pallas_call(
        functools.partial(_dense_kernel, activation=activation),
        out_shape=jax.ShapeDtypeStruct((M, N), jnp.bfloat16),
        grid_spec=pltpu.PrefetchScalarGridSpec(
            num_scalar_prefetch=0,
            grid=grid,
            in_specs=[
                pl.BlockSpec((tm, tk), lambda i, j, k: (i, k)),
                pl.BlockSpec((tk, tn), lambda i, j, k: (k, j)),
                pl.BlockSpec((1, tn), lambda i, j, k: (0, j)),
            ],
            out_specs=pl.BlockSpec((tm, tn), lambda i, j, k: (i, j)),
            scratch_shapes=[pltpu.VMEM((tm, tn), jnp.float32)],
        ),
        # Footprint at tm=tn=tk=512 (bf16 tiles, f32 acc) is ~4 MiB, well under
        # every generation's default scoped VMEM -> no explicit limit needed.
        compiler_params=pltpu.CompilerParams(
            dimension_semantics=("parallel", "parallel", "arbitrary"),
        ),
        cost_estimate=cost,
    )(x, w, b.reshape(1, N).astype(jnp.float32))


# ----------------------------------------------------------------------------
# LayerNorm core (f32 math) + standalone LN kernel (embeddings)
# ----------------------------------------------------------------------------
def _ln_core(x, g, b, eps):
    mu = jnp.mean(x, axis=-1, keepdims=True)
    var = jnp.mean(jnp.square(x - mu), axis=-1, keepdims=True)
    return (x - mu) * jax.lax.rsqrt(var + eps) * g + b


def _ln_kernel(x_ref, g_ref, b_ref, o_ref, *, eps):
    x = x_ref[...].astype(jnp.float32)
    o_ref[...] = _ln_core(x, g_ref[...], b_ref[...], eps).astype(o_ref.dtype)


def layernorm(x, g, b, eps=1e-12):
    M, H = x.shape
    tm = _pick_tile(M, (512, 256, 128))   # capped at 512 for v5e scoped VMEM
    row_spec = pl.BlockSpec((tm, H), lambda i: (i, 0))
    vec_spec = pl.BlockSpec((1, H), lambda i: (0, 0))
    return pl.pallas_call(
        functools.partial(_ln_kernel, eps=eps),
        out_shape=jax.ShapeDtypeStruct((M, H), jnp.bfloat16),
        grid=(M // tm,),
        in_specs=[row_spec, vec_spec, vec_spec],
        out_specs=row_spec,
        compiler_params=pltpu.CompilerParams(dimension_semantics=("parallel",)),
    )(x, g.reshape(1, H), b.reshape(1, H))


# ----------------------------------------------------------------------------
# Fused dense + residual add + LayerNorm (tn = N = H so LN rides the flush):
#   out = LayerNorm(x @ w + b + residual)
# ----------------------------------------------------------------------------
def _dense_res_ln_kernel(x_ref, w_ref, b_ref, r_ref, g_ref, bb_ref, o_ref,
                         acc_ref, *, eps):
    @pl.when(pl.program_id(1) == 0)
    def _():
        acc_ref[...] = jnp.zeros_like(acc_ref)

    acc_ref[...] += jnp.dot(x_ref[...], w_ref[...],
                            preferred_element_type=jnp.float32)

    @pl.when(pl.program_id(1) == pl.num_programs(1) - 1)
    def _():
        y = acc_ref[...] + b_ref[...] + r_ref[...].astype(jnp.float32)
        o_ref[...] = _ln_core(y, g_ref[...], bb_ref[...], eps).astype(o_ref.dtype)


def dense_res_ln(x, w, b, residual, g, beta, eps=1e-12):
    M, K = x.shape
    N = w.shape[1]                       # full hidden width in one block
    tm = _pick_tile(M, (512, 256, 128))
    tk = _pick_tile(K, (512, 256, 128))
    grid = (M // tm, K // tk)
    cost = pl.CostEstimate(
        flops=2 * M * N * K,
        transcendentals=0,
        bytes_accessed=M * K * 2 + K * N * 2 + 2 * M * N * 2,
    )
    return pl.pallas_call(
        functools.partial(_dense_res_ln_kernel, eps=eps),
        out_shape=jax.ShapeDtypeStruct((M, N), jnp.bfloat16),
        grid_spec=pltpu.PrefetchScalarGridSpec(
            num_scalar_prefetch=0,
            grid=grid,
            in_specs=[
                pl.BlockSpec((tm, tk), lambda i, k: (i, k)),
                pl.BlockSpec((tk, N), lambda i, k: (k, 0)),
                pl.BlockSpec((1, N), lambda i, k: (0, 0)),
                pl.BlockSpec((tm, N), lambda i, k: (i, 0)),   # residual
                pl.BlockSpec((1, N), lambda i, k: (0, 0)),    # gamma
                pl.BlockSpec((1, N), lambda i, k: (0, 0)),    # beta
            ],
            out_specs=pl.BlockSpec((tm, N), lambda i, k: (i, 0)),
            scratch_shapes=[pltpu.VMEM((tm, N), jnp.float32)],
        ),
        compiler_params=pltpu.CompilerParams(
            dimension_semantics=("parallel", "arbitrary"),
        ),
        cost_estimate=cost,
    )(x, w, b.reshape(1, N).astype(jnp.float32), residual,
      g.reshape(1, N), beta.reshape(1, N))


# ----------------------------------------------------------------------------
# Fused masked self-attention, one grid step per sample, all heads in-kernel.
#   qkv:  (BC, S, 3H) bf16 -- fused Q|K|V projection output (q pre-scaled)
#   mask: (BC, 1, S)  f32  -- additive bias (0 keep, -1e9 pad)
#   out:  (BC, S, H)  bf16 -- lane-dense output block
# ----------------------------------------------------------------------------
def _attn_kernel(qkv_ref, m_ref, o_ref, *, nh, dh):
    H = nh * dh
    mask = m_ref[0]                                          # (1, S) f32
    # Static per-head slices; each head's result is stored straight into the
    # output block (no jnp.concatenate -> no nh live f32 head outputs, no
    # relayout copy).  Offsets are static so lane slicing stays static.
    # TODO(synk): pair-of-heads 128-lane-aligned batched dot_general would
    # avoid 64-lane-offset relayouts on v6e/v7x for dh=64.
    for h in range(nh):
        q = qkv_ref[0, :, pl.ds(h * dh, dh)]                 # (S, dh) bf16
        k = qkv_ref[0, :, pl.ds(H + h * dh, dh)]             # (S, dh)
        v = qkv_ref[0, :, pl.ds(2 * H + h * dh, dh)]         # (S, dh)

        # QK^T without materializing k.T (scale already folded into Wq).
        s = jax.lax.dot_general(
            q, k, (((1,), (1,)), ((), ())),
            preferred_element_type=jnp.float32,
        )                                                    # (S, S) f32
        s = s + mask                                         # mask add in f32

        s_max = jnp.max(s, axis=-1, keepdims=True)
        p = jnp.exp(s - s_max)
        denom = jnp.sum(p, axis=-1, keepdims=True)
        p = p * pl.reciprocal(denom, approx=True)

        o = jnp.dot(p.astype(jnp.bfloat16), v,
                    preferred_element_type=jnp.float32)      # (S, dh)
        o_ref[0, :, pl.ds(h * dh, dh)] = o.astype(o_ref.dtype)


def attention(qkv, mask_bias, *, nh, dh):
    BC, S, H3 = qkv.shape
    H = nh * dh
    cost = pl.CostEstimate(
        flops=4 * BC * nh * S * S * dh,
        transcendentals=BC * nh * S * S,
        bytes_accessed=BC * S * H3 * 2 + BC * S * 4 + BC * S * H * 2,
    )
    return pl.pallas_call(
        functools.partial(_attn_kernel, nh=nh, dh=dh),
        out_shape=jax.ShapeDtypeStruct((BC, S, H), jnp.bfloat16),
        grid=(BC,),
        in_specs=[
            pl.BlockSpec((1, S, H3), lambda b: (b, 0, 0)),
            pl.BlockSpec((1, 1, S), lambda b: (b, 0, 0)),
        ],
        out_specs=pl.BlockSpec((1, S, H), lambda b: (b, 0, 0)),
        compiler_params=pltpu.CompilerParams(dimension_semantics=("parallel",)),
        cost_estimate=cost,
    )(qkv, mask_bias)


# ----------------------------------------------------------------------------
# Parameter init (deterministic, mimics _init_weights: normal(0, 0.02), zero bias)
# ----------------------------------------------------------------------------
def init_params(key, cfg):
    std = 0.02
    H, I = cfg["hidden"], cfg["intermediate"]
    keys = iter(jax.random.split(key, 8 + 12 * cfg["layers"]))

    def nrm(shape):
        return std * jax.random.normal(next(keys), shape, jnp.float32)

    params = {
        "word_emb": nrm((cfg["vocab"], H)),
        "pos_emb": nrm((cfg["max_pos"], H)),
        "type_emb": nrm((cfg["type_vocab"], H)),
        "emb_ln_g": jnp.ones((H,), jnp.float32),
        "emb_ln_b": jnp.zeros((H,), jnp.float32),
        "pooler_w": nrm((H, H)),
        "pooler_b": jnp.zeros((H,), jnp.float32),
        "cls_w": nrm((H, 1)),
        "cls_b": jnp.zeros((1,), jnp.float32),
        "layers": [],
    }
    for _ in range(cfg["layers"]):
        params["layers"].append({
            "wq": nrm((H, H)), "bq": jnp.zeros((H,), jnp.float32),
            "wk": nrm((H, H)), "bk": jnp.zeros((H,), jnp.float32),
            "wv": nrm((H, H)), "bv": jnp.zeros((H,), jnp.float32),
            "wo": nrm((H, H)), "bo": jnp.zeros((H,), jnp.float32),
            "ln1_g": jnp.ones((H,), jnp.float32), "ln1_b": jnp.zeros((H,), jnp.float32),
            "w1": nrm((H, I)), "b1": jnp.zeros((I,), jnp.float32),
            "w2": nrm((I, H)), "b2": jnp.zeros((H,), jnp.float32),
            "ln2_g": jnp.ones((H,), jnp.float32), "ln2_b": jnp.zeros((H,), jnp.float32),
        })
    return params


def prepare_params(params, cfg):
    """One-time weight prep: fuse QKV, fold 1/sqrt(dh) into Wq/bq, cast matmul
    weights to bf16.  forward() does zero per-call weight reshuffling."""
    H = cfg["hidden"]
    dh = H // cfg["heads"]
    scale = 1.0 / (dh ** 0.5)
    p = {
        "word_emb": params["word_emb"],
        "pos_emb": params["pos_emb"],
        "type_emb": params["type_emb"],
        "emb_ln_g": params["emb_ln_g"], "emb_ln_b": params["emb_ln_b"],
        "pooler_w": params["pooler_w"], "pooler_b": params["pooler_b"],
        "cls_w": params["cls_w"], "cls_b": params["cls_b"],
        "layers": [],
    }
    for l in params["layers"]:
        wqkv = jnp.concatenate([l["wq"] * scale, l["wk"], l["wv"]],
                               axis=1).astype(jnp.bfloat16)          # (H, 3H)
        bqkv = jnp.concatenate([l["bq"] * scale, l["bk"], l["bv"]])  # (3H,) f32
        p["layers"].append({
            "wqkv": wqkv, "bqkv": bqkv,
            "wo": l["wo"].astype(jnp.bfloat16), "bo": l["bo"],
            "w1": l["w1"].astype(jnp.bfloat16), "b1": l["b1"],
            "w2": l["w2"].astype(jnp.bfloat16), "b2": l["b2"],
            "ln1_g": l["ln1_g"], "ln1_b": l["ln1_b"],
            "ln2_g": l["ln2_g"], "ln2_b": l["ln2_b"],
        })
    return p


# ----------------------------------------------------------------------------
# Forward: (B, C, S) -> (B, C) multiple-choice logits
# ----------------------------------------------------------------------------
def forward(params, input_ids, attention_mask, token_type_ids, cfg):
    B, C, S = input_ids.shape
    H = cfg["hidden"]
    nh = cfg["heads"]
    dh = H // nh
    BC = B * C

    ids = input_ids.reshape(BC, S)
    tts = token_type_ids.reshape(BC, S)
    am = attention_mask.reshape(BC, S).astype(jnp.float32)

    # Embeddings (gathers stay in plain JAX), LN -> bf16 activations in HBM.
    x = (params["word_emb"][ids]
         + params["pos_emb"][:S][None, :, :]
         + params["type_emb"][tts])                          # (BC, S, H) f32
    x = layernorm(x.reshape(BC * S, H), params["emb_ln_g"], params["emb_ln_b"])

    # NOTE: dropout(p=0.2) is a no-op in eval mode, so omitted.
    mask_bias = ((1.0 - am) * -1e9).reshape(BC, 1, S)

    for l in params["layers"]:
        # Fused Q|K|V projection: one (M, H) x (H, 3H) matmul (pre-fused weight).
        qkv = dense(x, l["wqkv"], l["bqkv"]).reshape(BC, S, 3 * H)
        attn = attention(qkv, mask_bias, nh=nh, dh=dh)       # (BC, S, H) bf16

        # wo matmul + residual + LN fused in one kernel.
        x = dense_res_ln(attn.reshape(BC * S, H), l["wo"], l["bo"],
                         residual=x, g=l["ln1_g"], beta=l["ln1_b"])

        # FFN: up-projection (larger tm allowed to cut weight-panel re-reads),
        # then down-projection + residual + LN fused.
        ff = dense(x, l["w1"], l["b1"], activation="gelu",
                   tm_candidates=(1024, 512, 256, 128))
        x = dense_res_ln(ff, l["w2"], l["b2"],
                         residual=x, g=l["ln2_g"], beta=l["ln2_b"])

    cls = x.reshape(BC, S, H)[:, 0, :].astype(jnp.float32)   # [CLS], (BC, H)
    # Pooler + classifier: M=BC, N<=H single-block matmuls -> pure pallas_call
    # overhead (idle MXU, one TC on v7x); per the perf review they stay in XLA.
    pooled = jnp.tanh(cls @ params["pooler_w"] + params["pooler_b"])
    logits = pooled @ params["cls_w"] + params["cls_b"]      # (BC, 1)
    return logits.reshape(B, C)


# TODO(synk): pretrained HF checkpoint loading has no Pallas equivalent; weights
# are synthesized deterministically per the module's _init_weights convention.

if __name__ == "__main__":
    cfg = dict(vocab=128, hidden=64, layers=2, heads=2,
               intermediate=128, max_pos=32, type_vocab=2)
    B, C, S = 2, 4, 16

    key = jax.random.PRNGKey(0)
    k_ids, k_len = jax.random.split(key, 2)
    input_ids = jax.random.randint(k_ids, (B, C, S), 0, cfg["vocab"], dtype=jnp.int32)
    lengths = jax.random.randint(k_len, (B, C), S // 2, S + 1)
    attention_mask = (jnp.arange(S)[None, None, :] < lengths[..., None]).astype(jnp.int32)
    token_type_ids = ((jnp.arange(S)[None, None, :] >= (S // 2)).astype(jnp.int32)
                      * jnp.ones((B, C, 1), jnp.int32))

    params = prepare_params(init_params(jax.random.PRNGKey(42), cfg), cfg)

    logits = forward(params, input_ids, attention_mask, token_type_ids, cfg)
    logits = jax.block_until_ready(logits)
    assert logits.shape == (B, C), logits.shape
    print("KERNEL_OK")
</pallas_src>

<mosaic_0001>
module attributes {stable_mosaic.version = 11 : i64} {
  func.func @_ln_kernel(%arg0: i32, %arg1: memref<128x64xf32, #tpu.memory_space<vmem>>, %arg2: memref<1x64xf32, #tpu.memory_space<vmem>>, %arg3: memref<1x64xf32, #tpu.memory_space<vmem>>, %arg4: memref<128x64xbf16, #tpu.memory_space<vmem>>) attributes {dimension_semantics = [#tpu.dimension_semantics<parallel>], iteration_bounds = array<i64: 1>, scalar_prefetch = 0 : i64, scratch_operands = 0 : i64, tpu.core_type = #tpu.core_type<tc>, window_params = [{transform_indices = @transform_0, window_bounds = array<i64: 128, 64>}, {pipeline_mode = #tpu.pipeline_mode<synchronous>, transform_indices = @transform_1, window_bounds = array<i64: 1, 64>}, {pipeline_mode = #tpu.pipeline_mode<synchronous>, transform_indices = @transform_2, window_bounds = array<i64: 1, 64>}, {transform_indices = @transform_3, window_bounds = array<i64: 128, 64>}]} {
    %c0 = arith.constant 0 : index
    %c0_0 = arith.constant 0 : index
    %0 = vector.load %arg1[%c0, %c0_0] : memref<128x64xf32, #tpu.memory_space<vmem>>, vector<128x64xf32>
    %c0_1 = arith.constant 0 : index
    %c0_2 = arith.constant 0 : index
    %1 = vector.load %arg2[%c0_1, %c0_2] : memref<1x64xf32, #tpu.memory_space<vmem>>, vector<1x64xf32>
    %c0_3 = arith.constant 0 : index
    %c0_4 = arith.constant 0 : index
    %2 = vector.load %arg3[%c0_3, %c0_4] : memref<1x64xf32, #tpu.memory_space<vmem>>, vector<1x64xf32>
    %cst = arith.constant dense<0.000000e+00> : vector<128xf32>
    %3 = vector.multi_reduction <add>, %0, %cst [1] : vector<128x64xf32> to vector<128xf32>
    %4 = vector.shape_cast %3 : vector<128xf32> to vector<128x1xf32>
    %cst_5 = arith.constant 6.400000e+01 : f32
    %5 = vector.broadcast %cst_5 : f32 to vector<128x1xf32>
    %6 = arith.divf %4, %5 : vector<128x1xf32>
    %7 = vector.broadcast %6 : vector<128x1xf32> to vector<128x64xf32>
    %8 = arith.subf %0, %7 : vector<128x64xf32>
    %9 = arith.mulf %8, %8 : vector<128x64xf32>
    %cst_6 = arith.constant dense<0.000000e+00> : vector<128xf32>
    %10 = vector.multi_reduction <add>, %9, %cst_6 [1] : vector<128x64xf32> to vector<128xf32>
    %11 = vector.shape_cast %10 : vector<128xf32> to vector<128x1xf32>
    %cst_7 = arith.constant 6.400000e+01 : f32
    %12 = vector.broadcast %cst_7 : f32 to vector<128x1xf32>
    %13 = arith.divf %11, %12 : vector<128x1xf32>
    %14 = vector.broadcast %6 : vector<128x1xf32> to vector<128x64xf32>
    %15 = arith.subf %0, %14 : vector<128x64xf32>
    %cst_8 = arith.constant 9.99999996E-13 : f32
    %16 = vector.broadcast %cst_8 : f32 to vector<128x1xf32>
    %17 = arith.addf %13, %16 : vector<128x1xf32>
    %18 = math.rsqrt %17 : vector<128x1xf32>
    %19 = vector.broadcast %18 : vector<128x1xf32> to vector<128x64xf32>
    %20 = arith.mulf %15, %19 : vector<128x64xf32>
    %21 = vector.broadcast %1 : vector<1x64xf32> to vector<128x64xf32>
    %22 = arith.mulf %20, %21 : vector<128x64xf32>
    %23 = vector.broadcast %2 : vector<1x64xf32> to vector<128x64xf32>
    %24 = arith.addf %22, %23 : vector<128x64xf32>
    %25 = arith.truncf %24 : vector<128x64xf32> to vector<128x64xbf16>
    %c0_9 = arith.constant 0 : index
    %c0_10 = arith.constant 0 : index
    %26 = vector.load %arg4[%c0_9, %c0_10] : memref<128x64xbf16, #tpu.memory_space<vmem>>, vector<128x64xbf16>
    tpu.vector_store %arg4[%c0_9, %c0_10], %25 {strides = array<i32>} : memref<128x64xbf16, #tpu.memory_space<vmem>>, vector<128x64xbf16>,
    return
  }
  func.func @transform_0(%arg0: i32) -> (i32, i32) {
    %c0_i32 = arith.constant 0 : i32
    %c0_i32_0 = arith.constant 0 : i32
    return %arg0, %c0_i32 : i32, i32
  }
  func.func @transform_1(%arg0: i32) -> (i32, i32) {
    %c0_i32 = arith.constant 0 : i32
    %c0_i32_0 = arith.constant 0 : i32
    %c0_i32_1 = arith.constant 0 : i32
    return %c0_i32, %c0_i32_0 : i32, i32
  }
  func.func @transform_2(%arg0: i32) -> (i32, i32) {
    %c0_i32 = arith.constant 0 : i32
    %c0_i32_0 = arith.constant 0 : i32
    %c0_i32_1 = arith.constant 0 : i32
    return %c0_i32, %c0_i32_0 : i32, i32
  }
  func.func @transform_3(%arg0: i32) -> (i32, i32) {
    %c0_i32 = arith.constant 0 : i32
    %c0_i32_0 = arith.constant 0 : i32
    return %arg0, %c0_i32 : i32, i32
  }
}

</mosaic_0001>

<llo_original>
// kernel: tpu_custom_call.1
$region0: #{tpu_custom_call.1}
  #allocation0 [shape = 'u32[]', space=smem, size = 0x4, offset = 0x4, fixed_abs, tag = 'smem constant byte address 0x4 - core index']
  #allocation1 [shape = 'u32[144,128]{1,0:T(1,128)}', space=vmem, size = 0x12000, scoped, tag = 'internal scratch']
  %s0 = inlined_call_operand.vmem [shape: f32[128,64], index: 0, kind: input, shape index: {}]
  %s1 = inlined_call_operand.vmem [shape: f32[1,64], index: 1, kind: input, shape index: {}]
  %s2 = inlined_call_operand.vmem [shape: f32[1,64], index: 2, kind: input, shape index: {}]
  %s3 = inlined_call_operand.vmem [shape: bf16[128,64], index: 3, kind: output, shape index: {}]
  %s4 = sld [smem:[#allocation0]]
  $region22: #{tpu_custom_call.1} parent=0
    _
  %s6 = ssub.s32 1, %s4
  %s7 = scalar_select 0, %s6, %s4
  // Predicated region
  $region2: #{tpu_custom_call.1} parent=0 // pred_check
    _
  $region3: #{tpu_custom_call.1} parent=0 // pred_check_branch
    %9 = sbr.rel (0) target = $region5
  $region4: #{tpu_custom_call.1} parent=0 // pred_region
    _
  $region5: #{tpu_custom_call.1} parent=0 // pred_fallthru
    _
  // Predicated region
  $region6: #{tpu_custom_call.1} parent=0 // pred_check
    _
  $region7: #{tpu_custom_call.1} parent=0 // pred_check_branch
    %11 = sbr.rel (0) target = $region9
  $region8: #{tpu_custom_call.1} parent=0 // pred_region
    _
  $region9: #{tpu_custom_call.1} parent=0 // pred_fallthru
    _
  // Predicated region
  $region10: #{tpu_custom_call.1} parent=0 // pred_check
    _
  $region11: #{tpu_custom_call.1} parent=0 // pred_check_branch
    %13 = sbr.rel (0) target = $region13
  $region12: #{tpu_custom_call.1} parent=0 // pred_region
    _
  $region13: #{tpu_custom_call.1} parent=0 // pred_fallthru
    _
  %v14 = vld [vmem:[%s0] sm:$0xff]
  %v15 = vld [vmem:[%s0 + $0x8] sm:$0xff]
  %v16 = vld [vmem:[%s0 + $0x10] sm:$0xff]
  %v17 = vld [vmem:[%s0 + $0x18] sm:$0xff]
  %v18 = vld [vmem:[%s0 + $0x20] sm:$0xff]
  %v19 = vld [vmem:[%s0 + $0x28] sm:$0xff]
  %v20 = vld [vmem:[%s0 + $0x30] sm:$0xff]
  %v21 = vld [vmem:[%s0 + $0x38] sm:$0xff]
  %v22 = vld [vmem:[%s0 + $0x40] sm:$0xff]
  %v23 = vld [vmem:[%s0 + $0x48] sm:$0xff]
  %v24 = vld [vmem:[%s0 + $0x50] sm:$0xff]
  %v25 = vld [vmem:[%s0 + $0x58] sm:$0xff]
  %v26 = vld [vmem:[%s0 + $0x60] sm:$0xff]
  %v27 = vld [vmem:[%s0 + $0x68] sm:$0xff]
  %v28 = vld [vmem:[%s0 + $0x70] sm:$0xff]
  %v29 = vld [vmem:[%s0 + $0x78] sm:$0xff]
  %v30 = vld [vmem:[%s1] sm:$0x1]
  %v31 = vld [vmem:[%s2] sm:$0x1]
  %vm32 = vcmask 523264
  %v33 = vsel %vm32, %v14, 0.0
  %34 = vadd.xlane.f32.xlu0 %v33
  %v35 = vpop.xlane.xlu0 %34
  %v36 = vsel %vm32, %v15, 0.0
  %37 = vadd.xlane.f32.xlu0 %v36
  %v38 = vpop.xlane.xlu0 %37
  %v39 = vsel %vm32, %v16, 0.0
  %40 = vadd.xlane.f32.xlu0 %v39
  %v41 = vpop.xlane.xlu0 %40
  %v42 = vsel %vm32, %v17, 0.0
  %43 = vadd.xlane.f32.xlu0 %v42
  %v44 = vpop.xlane.xlu0 %43
  %v45 = vsel %vm32, %v18, 0.0
  %46 = vadd.xlane.f32.xlu0 %v45
  %v47 = vpop.xlane.xlu0 %46
  %v48 = vsel %vm32, %v19, 0.0
  %49 = vadd.xlane.f32.xlu0 %v48
  %v50 = vpop.xlane.xlu0 %49
  %v51 = vsel %vm32, %v20, 0.0
  %52 = vadd.xlane.f32.xlu0 %v51
  %v53 = vpop.xlane.xlu0 %52
  %v54 = vsel %vm32, %v21, 0.0
  %55 = vadd.xlane.f32.xlu0 %v54
  %v56 = vpop.xlane.xlu0 %55
  %v57 = vsel %vm32, %v22, 0.0
  %58 = vadd.xlane.f32.xlu0 %v57
  %v59 = vpop.xlane.xlu0 %58
  %v60 = vsel %vm32, %v23, 0.0
  %61 = vadd.xlane.f32.xlu0 %v60
  %v62 = vpop.xlane.xlu0 %61
  %v63 = vsel %vm32, %v24, 0.0
  %64 = vadd.xlane.f32.xlu0 %v63
  %v65 = vpop.xlane.xlu0 %64
  %v66 = vsel %vm32, %v25, 0.0
  %67 = vadd.xlane.f32.xlu0 %v66
  %v68 = vpop.xlane.xlu0 %67
  %v69 = vsel %vm32, %v26, 0.0
  %70 = vadd.xlane.f32.xlu0 %v69
  %v71 = vpop.xlane.xlu0 %70
  %v72 = vsel %vm32, %v27, 0.0
  %73 = vadd.xlane.f32.xlu0 %v72
  %v74 = vpop.xlane.xlu0 %73
  %v75 = vsel %vm32, %v28, 0.0
  %76 = vadd.xlane.f32.xlu0 %v75
  %v77 = vpop.xlane.xlu0 %76
  %v78 = vsel %vm32, %v29, 0.0
  %79 = vadd.xlane.f32.xlu0 %v78
  %v80 = vpop.xlane.xlu0 %79
  %v81 = vrcp.pop 64.0
  %v82 = vmul.f32 %v35, %v81
  %v83 = vmul.f32 %v38, %v81
  %v84 = vmul.f32 %v41, %v81
  %v85 = vmul.f32 %v44, %v81
  %v86 = vmul.f32 %v47, %v81
  %v87 = vmul.f32 %v50, %v81
  %v88 = vmul.f32 %v53, %v81
  %v89 = vmul.f32 %v56, %v81
  %v90 = vmul.f32 %v59, %v81
  %v91 = vmul.f32 %v62, %v81
  %v92 = vmul.f32 %v65, %v81
  %v93 = vmul.f32 %v68, %v81
  %v94 = vmul.f32 %v71, %v81
  %v95 = vmul.f32 %v74, %v81
  %v96 = vmul.f32 %v77, %v81
  %v97 = vmul.f32 %v80, %v81
  %v98 = vsub.f32 %v14, %v82
  %v99 = vsub.f32 %v15, %v83
  %v100 = vsub.f32 %v16, %v84
  %v101 = vsub.f32 %v17, %v85
  %v102 = vsub.f32 %v18, %v86
  %v103 = vsub.f32 %v19, %v87
  %v104 = vsub.f32 %v20, %v88
  %v105 = vsub.f32 %v21, %v89
  %v106 = vsub.f32 %v22, %v90
  %v107 = vsub.f32 %v23, %v91
  %v108 = vsub.f32 %v24, %v92
  %v109 = vsub.f32 %v25, %v93
  %v110 = vsub.f32 %v26, %v94
  %v111 = vsub.f32 %v27, %v95
  %v112 = vsub.f32 %v28, %v96
  %v113 = vsub.f32 %v29, %v97
  %v114 = vmul.f32 %v98, %v98
  %v115 = vmul.f32 %v99, %v99
  %v116 = vmul.f32 %v100, %v100
  %v117 = vmul.f32 %v101, %v101
  %v118 = vmul.f32 %v102, %v102
  %v119 = vmul.f32 %v103, %v103
  %v120 = vmul.f32 %v104, %v104
  %v121 = vmul.f32 %v105, %v105
  %v122 = vmul.f32 %v106, %v106
  %v123 = vmul.f32 %v107, %v107
  %v124 = vmul.f32 %v108, %v108
  %v125 = vmul.f32 %v109, %v109
  %v126 = vmul.f32 %v110, %v110
  %v127 = vmul.f32 %v111, %v111
  %v128 = vmul.f32 %v112, %v112
  %v129 = vmul.f32 %v113, %v113
  %v130 = vsel %vm32, %v114, 0.0
  %131 = vadd.xlane.f32.xlu0 %v130
  %v132 = vpop.xlane.xlu0 %131
  %v133 = vsel %vm32, %v115, 0.0
  %134 = vadd.xlane.f32.xlu0 %v133
  %v135 = vpop.xlane.xlu0 %134
  %v136 = vsel %vm32, %v116, 0.0
  %137 = vadd.xlane.f32.xlu0 %v136
  %v138 = vpop.xlane.xlu0 %137
  %v139 = vsel %vm32, %v117, 0.0
  %140 = vadd.xlane.f32.xlu0 %v139
  %v141 = vpop.xlane.xlu0 %140
  %v142 = vsel %vm32, %v118, 0.0
  %143 = vadd.xlane.f32.xlu0 %v142
  %v144 = vpop.xlane.xlu0 %143
  %v145 = vsel %vm32, %v119, 0.0
  %146 = vadd.xlane.f32.xlu0 %v145
  %v147 = vpop.xlane.xlu0 %146
  %v148 = vsel %vm32, %v120, 0.0
  %149 = vadd.xlane.f32.xlu0 %v148
  %v150 = vpop.xlane.xlu0 %149
  %v151 = vsel %vm32, %v121, 0.0
  %152 = vadd.xlane.f32.xlu0 %v151
  %v153 = vpop.xlane.xlu0 %152
  %v154 = vsel %vm32, %v122, 0.0
  %155 = vadd.xlane.f32.xlu0 %v154
  %v156 = vpop.xlane.xlu0 %155
  %v157 = vsel %vm32, %v123, 0.0
  %158 = vadd.xlane.f32.xlu0 %v157
  %v159 = vpop.xlane.xlu0 %158
  %v160 = vsel %vm32, %v124, 0.0
  %161 = vadd.xlane.f32.xlu0 %v160
  %v162 = vpop.xlane.xlu0 %161
  %v163 = vsel %vm32, %v125, 0.0
  %164 = vadd.xlane.f32.xlu0 %v163
  %v165 = vpop.xlane.xlu0 %164
  %v166 = vsel %vm32, %v126, 0.0
  %167 = vadd.xlane.f32.xlu0 %v166
  %v168 = vpop.xlane.xlu0 %167
  %v169 = vsel %vm32, %v127, 0.0
  %170 = vadd.xlane.f32.xlu0 %v169
  %v171 = vpop.xlane.xlu0 %170
  %v172 = vsel %vm32, %v128, 0.0
  %173 = vadd.xlane.f32.xlu0 %v172
  %v174 = vpop.xlane.xlu0 %173
  %v175 = vsel %vm32, %v129, 0.0
  %176 = vadd.xlane.f32.xlu0 %v175
  %v177 = vpop.xlane.xlu0 %176
  %v178 = vmul.f32 %v132, %v81
  %v179 = vmul.f32 %v135, %v81
  %v180 = vmul.f32 %v138, %v81
  %v181 = vmul.f32 %v141, %v81
  %v182 = vmul.f32 %v144, %v81
  %v183 = vmul.f32 %v147, %v81
  %v184 = vmul.f32 %v150, %v81
  %v185 = vmul.f32 %v153, %v81
  %v186 = vmul.f32 %v156, %v81
  %v187 = vmul.f32 %v159, %v81
  %v188 = vmul.f32 %v162, %v81
  %v189 = vmul.f32 %v165, %v81
  %v190 = vmul.f32 %v168, %v81
  %v191 = vmul.f32 %v171, %v81
  %v192 = vmul.f32 %v174, %v81
  %v193 = vmul.f32 %v177, %v81
  %v194 = vadd.f32 %v178, 1e-12
  %v195 = vadd.f32 %v179, 1e-12
  %v196 = vadd.f32 %v180, 1e-12
  %v197 = vadd.f32 %v181, 1e-12
  %v198 = vadd.f32 %v182, 1e-12
  %v199 = vadd.f32 %v183, 1e-12
  %v200 = vadd.f32 %v184, 1e-12
  %v201 = vadd.f32 %v185, 1e-12
  %v202 = vadd.f32 %v186, 1e-12
  %v203 = vadd.f32 %v187, 1e-12
  %v204 = vadd.f32 %v188, 1e-12
  %v205 = vadd.f32 %v189, 1e-12
  %v206 = vadd.f32 %v190, 1e-12
  %v207 = vadd.f32 %v191, 1e-12
  %v208 = vadd.f32 %v192, 1e-12
  %v209 = vadd.f32 %v193, 1e-12
  %v210 = vrsqrt.pop %v194
  %v211 = vrsqrt.pop %v195
  %v212 = vrsqrt.pop %v196
  %v213 = vrsqrt.pop %v197
  %v214 = vrsqrt.pop %v198
  %v215 = vrsqrt.pop %v199
  %v216 = vrsqrt.pop %v200
  %v217 = vrsqrt.pop %v201
  %v218 = vrsqrt.pop %v202
  %v219 = vrsqrt.pop %v203
  %v220 = vrsqrt.pop %v204
  %v221 = vrsqrt.pop %v205
  %v222 = vrsqrt.pop %v206
  %v223 = vrsqrt.pop %v207
  %v224 = vrsqrt.pop %v208
  %v225 = vrsqrt.pop %v209
  %v226 = vmul.f32 %v98, %v210
  %v227 = vmul.f32 %v99, %v211
  %v228 = vmul.f32 %v100, %v212
  %v229 = vmul.f32 %v101, %v213
  %v230 = vmul.f32 %v102, %v214
  %v231 = vmul.f32 %v103, %v215
  %v232 = vmul.f32 %v104, %v216
  %v233 = vmul.f32 %v105, %v217
  %v234 = vmul.f32 %v106, %v218
  %v235 = vmul.f32 %v107, %v219
  %v236 = vmul.f32 %v108, %v220
  %v237 = vmul.f32 %v109, %v221
  %v238 = vmul.f32 %v110, %v222
  %v239 = vmul.f32 %v111, %v223
  %v240 = vmul.f32 %v112, %v224
  %v241 = vmul.f32 %v113, %v225
  %v243 = vlaneseq
  %v244 = vshrl.u32 %v243, 7
  %v245 = vsub.s32 0, %v244
  %v246 = vrot.slane %v30, %v245
  %v248 = vmul.f32 %v226, %v246
  %v249 = vmul.f32 %v227, %v246
  %v250 = vmul.f32 %v228, %v246
  %v251 = vmul.f32 %v229, %v246
  %v252 = vmul.f32 %v230, %v246
  %v253 = vmul.f32 %v231, %v246
  %v254 = vmul.f32 %v232, %v246
  %v255 = vmul.f32 %v233, %v246
  %v256 = vmul.f32 %v234, %v246
  %v257 = vmul.f32 %v235, %v246
  %v258 = vmul.f32 %v236, %v246
  %v259 = vmul.f32 %v237, %v246
  %v260 = vmul.f32 %v238, %v246
  %v261 = vmul.f32 %v239, %v246
  %v262 = vmul.f32 %v240, %v246
  %v263 = vmul.f32 %v241, %v246
  %v265 = vlaneseq
  %v266 = vshrl.u32 %v265, 7
  %v267 = vsub.s32 0, %v266
  %v268 = vrot.slane %v31, %v267
  %v270 = vadd.f32 %v248, %v268
  %v271 = vadd.f32 %v249, %v268
  %v272 = vadd.f32 %v250, %v268
  %v273 = vadd.f32 %v251, %v268
  %v274 = vadd.f32 %v252, %v268
  %v275 = vadd.f32 %v253, %v268
  %v276 = vadd.f32 %v254, %v268
  %v277 = vadd.f32 %v255, %v268
  %v278 = vadd.f32 %v256, %v268
  %v279 = vadd.f32 %v257, %v268
  %v280 = vadd.f32 %v258, %v268
  %v281 = vadd.f32 %v259, %v268
  %v282 = vadd.f32 %v260, %v268
  %v283 = vadd.f32 %v261, %v268
  %v284 = vadd.f32 %v262, %v268
  %v285 = vadd.f32 %v263, %v268
  %v286 = vpack.c.bf16 %v271, %v270
  %v287 = vpack.c.bf16 %v273, %v272
  %v288 = vpack.c.bf16 %v275, %v274
  %v289 = vpack.c.bf16 %v277, %v276
  %v290 = vpack.c.bf16 %v279, %v278
  %v291 = vpack.c.bf16 %v281, %v280
  %v292 = vpack.c.bf16 %v283, %v282
  %v293 = vpack.c.bf16 %v285, %v284
  %v302 = vunpack.c.l.b16 %v286
  %v303 = vunpack.c.h.b16 %v286
  %v304 = vunpack.c.l.b16 %v287
  %v305 = vunpack.c.h.b16 %v287
  %v306 = vunpack.c.l.b16 %v288
  %v307 = vunpack.c.h.b16 %v288
  %v308 = vunpack.c.l.b16 %v289
  %v309 = vunpack.c.h.b16 %v289
  %v310 = vunpack.c.l.b16 %v290
  %v311 = vunpack.c.h.b16 %v290
  %v312 = vunpack.c.l.b16 %v291
  %v313 = vunpack.c.h.b16 %v291
  %v314 = vunpack.c.l.b16 %v292
  %v315 = vunpack.c.h.b16 %v292
  %v316 = vunpack.c.l.b16 %v293
  %v317 = vunpack.c.h.b16 %v293
  %v318 = vpack.c.b16 %v302, %v302
  %v319 = vpack.c.b16 %v303, %v303
  %v320 = vpack.c.b16 %v304, %v304
  %v321 = vpack.c.b16 %v305, %v305
  %v322 = vpack.c.b16 %v306, %v306
  %v323 = vpack.c.b16 %v307, %v307
  %v324 = vpack.c.b16 %v308, %v308
  %v325 = vpack.c.b16 %v309, %v309
  %v326 = vpack.c.b16 %v310, %v310
  %v327 = vpack.c.b16 %v311, %v311
  %v328 = vpack.c.b16 %v312, %v312
  %v329 = vpack.c.b16 %v313, %v313
  %v330 = vpack.c.b16 %v314, %v314
  %v331 = vpack.c.b16 %v315, %v315
  %v332 = vpack.c.b16 %v316, %v316
  %v333 = vpack.c.b16 %v317, %v317
  %vm350 = vcmask 519168
  %351 = vst.msk [vmem:[%s3] sm:$0xf] %vm350, %v318
  %352 = vst.msk [vmem:[%s3 + $0x4] sm:$0xf] %vm350, %v319
  %353 = vst.msk [vmem:[%s3 + $0x8] sm:$0xf] %vm350, %v320
  %354 = vst.msk [vmem:[%s3 + $0xc] sm:$0xf] %vm350, %v321
  %355 = vst.msk [vmem:[%s3 + $0x10] sm:$0xf] %vm350, %v322
  %356 = vst.msk [vmem:[%s3 + $0x14] sm:$0xf] %vm350, %v323
  %357 = vst.msk [vmem:[%s3 + $0x18] sm:$0xf] %vm350, %v324
  %358 = vst.msk [vmem:[%s3 + $0x1c] sm:$0xf] %vm350, %v325
  %359 = vst.msk [vmem:[%s3 + $0x20] sm:$0xf] %vm350, %v326
  %360 = vst.msk [vmem:[%s3 + $0x24] sm:$0xf] %vm350, %v327
  %361 = vst.msk [vmem:[%s3 + $0x28] sm:$0xf] %vm350, %v328
  %362 = vst.msk [vmem:[%s3 + $0x2c] sm:$0xf] %vm350, %v329
  %363 = vst.msk [vmem:[%s3 + $0x30] sm:$0xf] %vm350, %v330
  %364 = vst.msk [vmem:[%s3 + $0x34] sm:$0xf] %vm350, %v331
  %365 = vst.msk [vmem:[%s3 + $0x38] sm:$0xf] %vm350, %v332
  %366 = vst.msk [vmem:[%s3 + $0x3c] sm:$0xf] %vm350, %v333
  // Predicated region
  $region14: #{tpu_custom_call.1} parent=0 // pred_check
    _
  $region15: #{tpu_custom_call.1} parent=0 // pred_check_branch
    %368 = sbr.rel (0) target = $region17
  $region16: #{tpu_custom_call.1} parent=0 // pred_region
    _
  $region17: #{tpu_custom_call.1} parent=0 // pred_fallthru
    _
  // Predicated region
  $region18: #{tpu_custom_call.1} parent=0 // pred_check
    _
  $region19: #{tpu_custom_call.1} parent=0 // pred_check_branch
    %370 = sbr.rel (0) target = $region21
  $region20: #{tpu_custom_call.1} parent=0 // pred_region
    _
  $region21: #{tpu_custom_call.1} parent=0 // pred_fallthru
    _

</llo_original>
